<compile_context>
chip_gen: v5e
topology: v5e:2x2
jax: 0.10.0
libtpu: 0.0.40
codegen_flags: <defaults>
</compile_context>

<pallas_src>
import functools

import jax
import jax.numpy as jnp
from jax import lax
from jax.experimental import pallas as pl
from jax.experimental.pallas import tpu as pltpu

D = 128          # padded lane width for all feature dims
HIDDEN = 10      # discriminator hidden size (as in the docstring example)
EPS = 1e-10


def gan_loss_kernel(x_ref, w_ref, b_ref, out_ref, *, data_dim):
    """Fused generator -> stacked discriminator -> (gen_loss, disc_loss)."""
    B = x_ref.shape[0] // 2

    d_train = x_ref[:B, :]          # [data  | cond | 0...]  (real half)
    g_in = x_ref[B:, :]             # [noise | cond | 0...]  (generator input)

    wg = w_ref[0]
    w1 = w_ref[1]
    w2 = w_ref[2]
    bg = b_ref[0:1, :]
    b1 = b_ref[1:2, :]
    b2 = b_ref[2:3, :]

    # ---- Generator: gen_out = [noise | cond] @ Wg + bg ----
    # Lanes >= data_dim of gen_out are exactly 0 because Wg / bg are zero-padded.
    gen_out = jnp.dot(g_in, wg, preferred_element_type=jnp.float32) + bg

    # cond-only part of the training input (zero the data lanes; lanes beyond
    # data_dim + cond_dim are already zero from the wrapper padding).
    lane_b = lax.broadcasted_iota(jnp.int32, (B, D), 1)
    cond_part = jnp.where(lane_b >= data_dim, d_train, 0.0)

    # ---- Stacked discriminator input [real | generated], built in-register ----
    x = jnp.concatenate([d_train, gen_out + cond_part], axis=0)      # (2B, D)

    # ---- Discriminator MLP over both halves at once (keep logits) ----
    h = jnp.maximum(
        jnp.dot(x, w1, preferred_element_type=jnp.float32) + b1, 0.0)
    o = jnp.dot(h, w2, preferred_element_type=jnp.float32) + b2

    # log(sigmoid(o)) and log(1 - sigmoid(o)) straight from the logits:
    #   log(sigmoid(o))     = min(o, 0) - log(1 + exp(-|o|))
    #   log(1 - sigmoid(o)) = log(sigmoid(o)) - o
    log_d = jnp.minimum(o, 0.0) - jnp.log(1.0 + jnp.exp(-jnp.abs(o)))
    log_1md = log_d - o

    # The wrapper duplicates W2/b2 output column 0 into column 1, so the logits
    # (and hence log_d / log_1md) in lane 1 equal lane 0.  Route gen-loss terms
    # to lane 0 and disc-loss terms to lane 1, then collapse with one sublane
    # (axis=0) reduction -> lane-dense (1, D) output with no cross-lane moves.
    lane = lax.broadcasted_iota(jnp.int32, (2 * B, D), 1)
    row = lax.broadcasted_iota(jnp.int32, (2 * B, D), 0)
    is_gen = row >= B                                   # second half = generated
    gen_terms = jnp.where(is_gen, log_d, 0.0)           # -> lane 0
    disc_terms = jnp.where(is_gen, log_1md, log_d)      # -> lane 1
    t = jnp.where(lane == 0, gen_terms,
                  jnp.where(lane == 1, disc_terms, 0.0))

    # (1, D) output: lane 0 = gen_loss, lane 1 = disc_loss, rest = 0.
    out_ref[...] = -jnp.sum(t, axis=0, keepdims=True) * (1.0 / B)


def init_params(key, noise_dim, data_dim, cond_dim, hidden=HIDDEN):
    """Deterministic init mimicking nn.Linear default (uniform +/- 1/sqrt(fan_in))."""
    ks = jax.random.split(key, 6)
    gin = noise_dim + cond_dim
    din = data_dim + cond_dim

    def lin(kw, kb, fan_in, fan_out):
        bound = 1.0 / (fan_in ** 0.5)
        w = jax.random.uniform(kw, (fan_in, fan_out), jnp.float32, -bound, bound)
        b = jax.random.uniform(kb, (fan_out,), jnp.float32, -bound, bound)
        return w, b

    wg, bg = lin(ks[0], ks[1], gin, 1)          # generator Linear(gin, 1)
    w1, b1 = lin(ks[2], ks[3], din, hidden)     # disc Linear(din, hidden)
    w2, b2 = lin(ks[4], ks[5], hidden, 1)       # disc Linear(hidden, 1)

    def pad_w(w, dup_col0_to_col1=False):
        out = jnp.zeros((D, D), jnp.float32).at[:w.shape[0], :w.shape[1]].set(w)
        if dup_col0_to_col1:
            out = out.at[:w.shape[0], 1].set(w[:, 0])
        return out

    def pad_b(b, dup_col0_to_col1=False):
        out = jnp.zeros((D,), jnp.float32).at[:b.shape[0]].set(b)
        if dup_col0_to_col1:
            out = out.at[1].set(b[0])
        return out

    # Pack the three layers into single kernel inputs (one DMA each).
    w_packed = jnp.stack([pad_w(wg), pad_w(w1), pad_w(w2, True)], axis=0)  # (3,D,D)
    b_packed = jnp.zeros((8, D), jnp.float32)                              # (8,D)
    b_packed = b_packed.at[0].set(pad_b(bg))
    b_packed = b_packed.at[1].set(pad_b(b1))
    b_packed = b_packed.at[2].set(pad_b(b2, True))

    small = (wg, bg, w1, b1, w2, b2)
    return small, (w_packed, b_packed)


def gan_forward(noise, data, cond, packed_params):
    """Returns (total_gen_loss, total_discrim_loss) for n_generators=n_discriminators=1."""
    B = noise.shape[0]
    nd, dd, cd = noise.shape[1], data.shape[1], cond.shape[1]
    w_packed, b_packed = packed_params

    # Lightweight wrapper packing: both activations share one (2B, D) buffer.
    d_train = jnp.pad(jnp.concatenate([data, cond], axis=1),
                      ((0, 0), (0, D - dd - cd)))                # [data  | cond | 0...]
    g_in = jnp.pad(jnp.concatenate([noise, cond], axis=1),
                   ((0, 0), (0, D - nd - cd)))                   # [noise | cond | 0...]
    x_packed = jnp.concatenate([d_train, g_in], axis=0)          # (2B, D)

    losses = pl.pallas_call(
        functools.partial(gan_loss_kernel, data_dim=dd),
        out_shape=jax.ShapeDtypeStruct((1, D), jnp.float32),
        grid=(1,),
        in_specs=[pl.BlockSpec((2 * B, D), lambda i: (0, 0)),
                  pl.BlockSpec((3, D, D), lambda i: (0, 0, 0)),
                  pl.BlockSpec((8, D), lambda i: (0, 0))],
        out_specs=pl.BlockSpec((1, D), lambda i: (0, 0)),
        compiler_params=pltpu.CompilerParams(
            dimension_semantics=("arbitrary",)),
    )(x_packed, w_packed, b_packed)

    return losses[0, 0], losses[0, 1]


def gan_forward_ref(noise, data, cond, small_params):
    """Pure-JAX reference matching the PyTorch forward semantics."""
    wg, bg, w1, b1, w2, b2 = small_params
    gen_out = jnp.concatenate([noise, cond], axis=1) @ wg + bg

    def disc(x):
        h = jax.nn.relu(jnp.concatenate([x, cond], axis=1) @ w1 + b1)
        return jax.nn.sigmoid(h @ w2 + b2)

    d_train = disc(data)
    d_gen = disc(gen_out)
    gen_loss = -jnp.mean(jnp.log(d_gen + EPS))
    disc_loss = -jnp.mean(jnp.log(d_train + EPS) + jnp.log(1.0 - d_gen + EPS))
    return gen_loss, disc_loss


if __name__ == "__main__":
    key = jax.random.PRNGKey(0)
    k_noise, k_data, k_cond, k_params = jax.random.split(key, 4)

    batch = 16
    noise_dim, data_dim, cond_dim = 2, 1, 1   # matches docstring ExampleGAN

    noise = jax.random.uniform(k_noise, (batch, noise_dim), jnp.float32)
    data = jax.random.uniform(k_data, (batch, data_dim), jnp.float32)
    cond = jax.random.uniform(k_cond, (batch, cond_dim), jnp.float32)

    small_params, packed_params = init_params(k_params, noise_dim, data_dim, cond_dim)

    gen_loss, disc_loss = jax.jit(gan_forward)(noise, data, cond, packed_params)
    jax.block_until_ready((gen_loss, disc_loss))

    gen_ref, disc_ref = gan_forward_ref(noise, data, cond, small_params)
    assert jnp.allclose(gen_loss, gen_ref, rtol=1e-3, atol=1e-3), (gen_loss, gen_ref)
    assert jnp.allclose(disc_loss, disc_ref, rtol=1e-3, atol=1e-3), (disc_loss, disc_ref)

    print("KERNEL_OK")
</pallas_src>

<mosaic_0001>
module attributes {stable_mosaic.version = 11 : i64} {
  func.func @gan_loss_kernel(%arg0: i32, %arg1: memref<32x128xf32, #tpu.memory_space<vmem>>, %arg2: memref<3x128x128xf32, #tpu.memory_space<vmem>>, %arg3: memref<8x128xf32, #tpu.memory_space<vmem>>, %arg4: memref<1x128xf32, #tpu.memory_space<vmem>>) attributes {dimension_semantics = [#tpu.dimension_semantics<arbitrary>], iteration_bounds = array<i64: 1>, scalar_prefetch = 0 : i64, scratch_operands = 0 : i64, tpu.core_type = #tpu.core_type<tc>, window_params = [{pipeline_mode = #tpu.pipeline_mode<synchronous>, transform_indices = @transform_0, window_bounds = array<i64: 32, 128>}, {pipeline_mode = #tpu.pipeline_mode<synchronous>, transform_indices = @transform_1, window_bounds = array<i64: 3, 128, 128>}, {pipeline_mode = #tpu.pipeline_mode<synchronous>, transform_indices = @transform_2, window_bounds = array<i64: 8, 128>}, {pipeline_mode = #tpu.pipeline_mode<synchronous>, transform_indices = @transform_3, window_bounds = array<i64: 1, 128>}]} {
    %c0 = arith.constant 0 : index
    %c0_0 = arith.constant 0 : index
    %0 = vector.load %arg1[%c0, %c0_0] : memref<32x128xf32, #tpu.memory_space<vmem>>, vector<16x128xf32>
    %c16 = arith.constant 16 : index
    %c0_1 = arith.constant 0 : index
    %1 = vector.load %arg1[%c16, %c0_1] : memref<32x128xf32, #tpu.memory_space<vmem>>, vector<16x128xf32>
    %c0_2 = arith.constant 0 : index
    %c0_3 = arith.constant 0 : index
    %c0_4 = arith.constant 0 : index
    %2 = vector.load %arg2[%c0_2, %c0_3, %c0_4] : memref<3x128x128xf32, #tpu.memory_space<vmem>>, vector<1x128x128xf32>
    %3 = vector.shape_cast %2 : vector<1x128x128xf32> to vector<128x128xf32>
    %c1 = arith.constant 1 : index
    %c0_5 = arith.constant 0 : index
    %c0_6 = arith.constant 0 : index
    %4 = vector.load %arg2[%c1, %c0_5, %c0_6] : memref<3x128x128xf32, #tpu.memory_space<vmem>>, vector<1x128x128xf32>
    %5 = vector.shape_cast %4 : vector<1x128x128xf32> to vector<128x128xf32>
    %c2 = arith.constant 2 : index
    %c0_7 = arith.constant 0 : index
    %c0_8 = arith.constant 0 : index
    %6 = vector.load %arg2[%c2, %c0_7, %c0_8] : memref<3x128x128xf32, #tpu.memory_space<vmem>>, vector<1x128x128xf32>
    %7 = vector.shape_cast %6 : vector<1x128x128xf32> to vector<128x128xf32>
    %c0_9 = arith.constant 0 : index
    %c0_10 = arith.constant 0 : index
    %8 = vector.load %arg3[%c0_9, %c0_10] : memref<8x128xf32, #tpu.memory_space<vmem>>, vector<1x128xf32>
    %c1_11 = arith.constant 1 : index
    %c0_12 = arith.constant 0 : index
    %9 = vector.load %arg3[%c1_11, %c0_12] : memref<8x128xf32, #tpu.memory_space<vmem>>, vector<1x128xf32>
    %c2_13 = arith.constant 2 : index
    %c0_14 = arith.constant 0 : index
    %10 = vector.load %arg3[%c2_13, %c0_14] : memref<8x128xf32, #tpu.memory_space<vmem>>, vector<1x128xf32>
    %cst = arith.constant dense<0.000000e+00> : vector<16x128xf32>
    %11 = tpu.matmul %1, %3, %cst {dimension_numbers = #tpu.dot_dimension_numbers<[1], [0], [0], [1], [0, 0, 1, 1], [], []>} : vector<16x128xf32>, vector<128x128xf32>, vector<16x128xf32> -> vector<16x128xf32>
    %12 = vector.broadcast %8 : vector<1x128xf32> to vector<16x128xf32>
    %13 = arith.addf %11, %12 : vector<16x128xf32>
    %14 = tpu.iota {dimensions = array<i32: 1>} : vector<16x128xi32>
    %c1_i32 = arith.constant 1 : i32
    %15 = vector.broadcast %c1_i32 : i32 to vector<16x128xi32>
    %16 = arith.cmpi sge, %14, %15 : vector<16x128xi32>
    %cst_15 = arith.constant 0.000000e+00 : f32
    %17 = vector.broadcast %cst_15 : f32 to vector<16x128xf32>
    %18 = arith.select %16, %0, %17 : vector<16x128xi1>, vector<16x128xf32>
    %19 = arith.addf %13, %18 : vector<16x128xf32>
    %20 = tpu.concatenate %0, %19 in 0 : vector<16x128xf32>, vector<16x128xf32> -> vector<32x128xf32>
    %cst_16 = arith.constant dense<0.000000e+00> : vector<32x128xf32>
    %21 = tpu.matmul %20, %5, %cst_16 {dimension_numbers = #tpu.dot_dimension_numbers<[1], [0], [0], [1], [0, 0, 1, 1], [], []>} : vector<32x128xf32>, vector<128x128xf32>, vector<32x128xf32> -> vector<32x128xf32>
    %22 = vector.broadcast %9 : vector<1x128xf32> to vector<32x128xf32>
    %23 = arith.addf %21, %22 : vector<32x128xf32>
    %cst_17 = arith.constant 0.000000e+00 : f32
    %24 = vector.broadcast %cst_17 : f32 to vector<32x128xf32>
    %25 = arith.maximumf %23, %24 : vector<32x128xf32>
    %cst_18 = arith.constant dense<0.000000e+00> : vector<32x128xf32>
    %26 = tpu.matmul %25, %7, %cst_18 {dimension_numbers = #tpu.dot_dimension_numbers<[1], [0], [0], [1], [0, 0, 1, 1], [], []>} : vector<32x128xf32>, vector<128x128xf32>, vector<32x128xf32> -> vector<32x128xf32>
    %27 = vector.broadcast %10 : vector<1x128xf32> to vector<32x128xf32>
    %28 = arith.addf %26, %27 : vector<32x128xf32>
    %cst_19 = arith.constant 0.000000e+00 : f32
    %29 = vector.broadcast %cst_19 : f32 to vector<32x128xf32>
    %30 = arith.minimumf %28, %29 : vector<32x128xf32>
    %31 = math.absf %28 : vector<32x128xf32>
    %cst_20 = arith.constant 0.000000e+00 : f32
    %32 = vector.broadcast %cst_20 : f32 to vector<32x128xf32>
    %33 = arith.subf %32, %31 : vector<32x128xf32>
    %34 = math.exp %33 : vector<32x128xf32>
    %cst_21 = arith.constant 1.000000e+00 : f32
    %35 = vector.broadcast %cst_21 : f32 to vector<32x128xf32>
    %36 = arith.addf %35, %34 : vector<32x128xf32>
    %37 = math.log %36 : vector<32x128xf32>
    %38 = arith.subf %30, %37 : vector<32x128xf32>
    %39 = arith.subf %38, %28 : vector<32x128xf32>
    %40 = tpu.iota {dimensions = array<i32: 1>} : vector<32x128xi32>
    %41 = tpu.iota {dimensions = array<i32: 0>} : vector<32x128xi32>
    %c16_i32 = arith.constant 16 : i32
    %42 = vector.broadcast %c16_i32 : i32 to vector<32x128xi32>
    %43 = arith.cmpi sge, %41, %42 : vector<32x128xi32>
    %cst_22 = arith.constant 0.000000e+00 : f32
    %44 = vector.broadcast %cst_22 : f32 to vector<32x128xf32>
    %45 = arith.select %43, %38, %44 : vector<32x128xi1>, vector<32x128xf32>
    %46 = arith.select %43, %39, %38 : vector<32x128xi1>, vector<32x128xf32>
    %c0_i32 = arith.constant 0 : i32
    %47 = vector.broadcast %c0_i32 : i32 to vector<32x128xi32>
    %48 = arith.cmpi eq, %40, %47 : vector<32x128xi32>
    %c1_i32_23 = arith.constant 1 : i32
    %49 = vector.broadcast %c1_i32_23 : i32 to vector<32x128xi32>
    %50 = arith.cmpi eq, %40, %49 : vector<32x128xi32>
    %cst_24 = arith.constant 0.000000e+00 : f32
    %51 = vector.broadcast %cst_24 : f32 to vector<32x128xf32>
    %52 = arith.select %50, %46, %51 : vector<32x128xi1>, vector<32x128xf32>
    %53 = arith.select %48, %45, %52 : vector<32x128xi1>, vector<32x128xf32>
    %cst_25 = arith.constant dense<0.000000e+00> : vector<128xf32>
    %54 = vector.multi_reduction <add>, %53, %cst_25 [0] : vector<32x128xf32> to vector<128xf32>
    %55 = vector.shape_cast %54 : vector<128xf32> to vector<1x128xf32>
    %cst_26 = arith.constant 0.000000e+00 : f32
    %56 = vector.broadcast %cst_26 : f32 to vector<1x128xf32>
    %57 = arith.subf %56, %55 : vector<1x128xf32>
    %cst_27 = arith.constant 6.250000e-02 : f32
    %58 = vector.broadcast %cst_27 : f32 to vector<1x128xf32>
    %59 = arith.mulf %57, %58 : vector<1x128xf32>
    %c0_28 = arith.constant 0 : index
    %c0_29 = arith.constant 0 : index
    %60 = vector.load %arg4[%c0_28, %c0_29] : memref<1x128xf32, #tpu.memory_space<vmem>>, vector<1x128xf32>
    tpu.vector_store %arg4[%c0_28, %c0_29], %59 {strides = array<i32>} : memref<1x128xf32, #tpu.memory_space<vmem>>, vector<1x128xf32>,
    return
  }
  func.func @transform_0(%arg0: i32) -> (i32, i32) {
    %c0_i32 = arith.constant 0 : i32
    %c0_i32_0 = arith.constant 0 : i32
    %c0_i32_1 = arith.constant 0 : i32
    return %c0_i32, %c0_i32_0 : i32, i32
  }
  func.func @transform_1(%arg0: i32) -> (i32, i32, i32) {
    %c0_i32 = arith.constant 0 : i32
    %c0_i32_0 = arith.constant 0 : i32
    %c0_i32_1 = arith.constant 0 : i32
    %c0_i32_2 = arith.constant 0 : i32
    return %c0_i32, %c0_i32_0, %c0_i32_1 : i32, i32, i32
  }
  func.func @transform_2(%arg0: i32) -> (i32, i32) {
    %c0_i32 = arith.constant 0 : i32
    %c0_i32_0 = arith.constant 0 : i32
    %c0_i32_1 = arith.constant 0 : i32
    return %c0_i32, %c0_i32_0 : i32, i32
  }
  func.func @transform_3(%arg0: i32) -> (i32, i32) {
    %c0_i32 = arith.constant 0 : i32
    %c0_i32_0 = arith.constant 0 : i32
    %c0_i32_1 = arith.constant 0 : i32
    return %c0_i32, %c0_i32_0 : i32, i32
  }
}

</mosaic_0001>

<llo_original>
// kernel: gan_forward.1
$region0: #{gan_forward.1}
  #allocation0 [shape = 'u32[]', space=smem, size = 0x4, offset = 0x4, fixed_abs, tag = 'smem constant byte address 0x4 - core index']
  #allocation1 [shape = 'u32[72,128]{1,0:T(1,128)}', space=vmem, size = 0x9000, scoped, tag = 'internal scratch']
  %s0 = inlined_call_operand.vmem [shape: f32[32,128], index: 0, kind: input, shape index: {}]
  %s1 = inlined_call_operand.hbm [shape: f32[3,128,128], index: 1, kind: input, shape index: {}]
  %s2 = inlined_call_operand.vmem [shape: f32[8,128], index: 2, kind: input, shape index: {}]
  %s3 = inlined_call_operand.vmem [shape: f32[1,128], index: 3, kind: output, shape index: {}]
  %s4 = sld [smem:[#allocation0]]
  $region26: #{gan_forward.1} parent=0
    _
  %s6 = ssub.s32 1, %s4
  %s7 = scalar_select 0, %s6, %s4
  $region1: #{gan_forward.1} parent=0
    #allocation2 [shape = 'u8[196608]{0}', space=vmem, size = 0x30000, scoped, tag = 'input window, operand 1, single buffered']
    #allocation3 [shape = 's32[1]{0}', space=sflag, size = 0x4, scoped, tag = 'scoped memory for gan_forward.1']
    %8 = vsyncpa [#allocation3], 0
    // Predicated region
    $region2: #{gan_forward.1} parent=1 // pred_check
      _
    $region3: #{gan_forward.1} parent=1 // pred_check_branch
      %10 = sbr.rel (0) target = $region5
    $region4: #{gan_forward.1} parent=1 // pred_region
      _
    $region5: #{gan_forward.1} parent=1 // pred_fallthru
      _
    // Predicated region
    $region6: #{gan_forward.1} parent=1 // pred_check
      _
    $region7: #{gan_forward.1} parent=1 // pred_check_branch
      %12 = sbr.rel (0) target = $region9
    $region8: #{gan_forward.1} parent=1 // pred_region
      %14 = vsyncadd [#allocation3], 0
      %s15 = sshll.u32 %s1, 4
      %s16 = int_to_ptr.hbm [resolvable:$true] %s15
      %s17 = sshll.u32 [#allocation2], 4
      %s18 = int_to_ptr.vmem [resolvable:$true] %s17
      %23 = dma.hbm_to_vmem [thread:$0]  %s16, 6144, %s18, [#allocation3], 128, 128, 8
    $region9: #{gan_forward.1} parent=1 // pred_fallthru
      _
    // Predicated region
    $region10: #{gan_forward.1} parent=1 // pred_check
      _
    $region11: #{gan_forward.1} parent=1 // pred_check_branch
      %25 = sbr.rel (0) target = $region13
    $region12: #{gan_forward.1} parent=1 // pred_region
      _
    $region13: #{gan_forward.1} parent=1 // pred_fallthru
      _
    // Predicated region
    $region14: #{gan_forward.1} parent=1 // pred_check
      _
    $region15: #{gan_forward.1} parent=1 // pred_check_branch
      %27 = sbr.rel (0) target = $region17
    $region16: #{gan_forward.1} parent=1 // pred_region
      %29 = dma.done [#allocation3], 6144
    $region17: #{gan_forward.1} parent=1 // pred_fallthru
      _
    %v30 = vld [vmem:[%s0] sm:$0xff]
    %v31 = vld [vmem:[%s0 + $0x8] sm:$0xff]
    %v32 = vld [vmem:[%s0 + $0x10] sm:$0xff]
    %v33 = vld [vmem:[%s0 + $0x18] sm:$0xff]
    %v34 = vld [vmem:[#allocation2] sm:$0xff]
    %v35 = vld [vmem:[#allocation2 + $0x8] sm:$0xff]
    %v36 = vld [vmem:[#allocation2 + $0x10] sm:$0xff]
    %v37 = vld [vmem:[#allocation2 + $0x18] sm:$0xff]
    %v38 = vld [vmem:[#allocation2 + $0x20] sm:$0xff]
    %v39 = vld [vmem:[#allocation2 + $0x28] sm:$0xff]
    %v40 = vld [vmem:[#allocation2 + $0x30] sm:$0xff]
    %v41 = vld [vmem:[#allocation2 + $0x38] sm:$0xff]
    %v42 = vld [vmem:[#allocation2 + $0x40] sm:$0xff]
    %v43 = vld [vmem:[#allocation2 + $0x48] sm:$0xff]
    %v44 = vld [vmem:[#allocation2 + $0x50] sm:$0xff]
    %v45 = vld [vmem:[#allocation2 + $0x58] sm:$0xff]
    %v46 = vld [vmem:[#allocation2 + $0x60] sm:$0xff]
    %v47 = vld [vmem:[#allocation2 + $0x68] sm:$0xff]
    %v48 = vld [vmem:[#allocation2 + $0x70] sm:$0xff]
    %v49 = vld [vmem:[#allocation2 + $0x78] sm:$0xff]
    %s50 = scalar_lea.vmem [#allocation2], 128
    %v51 = vld [vmem:[%s50] sm:$0xff]
    %v52 = vld [vmem:[%s50 + $0x8] sm:$0xff]
    %v53 = vld [vmem:[%s50 + $0x10] sm:$0xff]
    %v54 = vld [vmem:[%s50 + $0x18] sm:$0xff]
    %v55 = vld [vmem:[%s50 + $0x20] sm:$0xff]
    %v56 = vld [vmem:[%s50 + $0x28] sm:$0xff]
    %v57 = vld [vmem:[%s50 + $0x30] sm:$0xff]
    %v58 = vld [vmem:[%s50 + $0x38] sm:$0xff]
    %v59 = vld [vmem:[%s50 + $0x40] sm:$0xff]
    %v60 = vld [vmem:[%s50 + $0x48] sm:$0xff]
    %v61 = vld [vmem:[%s50 + $0x50] sm:$0xff]
    %v62 = vld [vmem:[%s50 + $0x58] sm:$0xff]
    %v63 = vld [vmem:[%s50 + $0x60] sm:$0xff]
    %v64 = vld [vmem:[%s50 + $0x68] sm:$0xff]
    %v65 = vld [vmem:[%s50 + $0x70] sm:$0xff]
    %v66 = vld [vmem:[%s50 + $0x78] sm:$0xff]
    %s67 = scalar_lea.vmem [#allocation2], 256
    %v68 = vld [vmem:[%s67] sm:$0xff]
    %v69 = vld [vmem:[%s67 + $0x8] sm:$0xff]
    %v70 = vld [vmem:[%s67 + $0x10] sm:$0xff]
    %v71 = vld [vmem:[%s67 + $0x18] sm:$0xff]
    %v72 = vld [vmem:[%s67 + $0x20] sm:$0xff]
    %v73 = vld [vmem:[%s67 + $0x28] sm:$0xff]
    %v74 = vld [vmem:[%s67 + $0x30] sm:$0xff]
    %v75 = vld [vmem:[%s67 + $0x38] sm:$0xff]
    %v76 = vld [vmem:[%s67 + $0x40] sm:$0xff]
    %v77 = vld [vmem:[%s67 + $0x48] sm:$0xff]
    %v78 = vld [vmem:[%s67 + $0x50] sm:$0xff]
    %v79 = vld [vmem:[%s67 + $0x58] sm:$0xff]
    %v80 = vld [vmem:[%s67 + $0x60] sm:$0xff]
    %v81 = vld [vmem:[%s67 + $0x68] sm:$0xff]
    %v82 = vld [vmem:[%s67 + $0x70] sm:$0xff]
    %v83 = vld [vmem:[%s67 + $0x78] sm:$0xff]
    %v84 = vld [vmem:[%s2] sm:$0x1]
    %v85 = vld [vmem:[%s2 + $0x1] sm:$0x1]
    %v86 = vld [vmem:[%s2 + $0x2] sm:$0x1]
    %v87 = vperm.slane %v84, 0
    %88 = vmatpush.msra.mxu0 %v49
    %89 = vmatpush.msra.mxu0 %v48
    %90 = vmatpush.msra.mxu0 %v47
    %91 = vmatpush.msra.mxu0 %v46
    %92 = vmatpush.msra.mxu0 %v45
    %93 = vmatpush.msra.mxu0 %v44
    %94 = vmatpush.msra.mxu0 %v43
    %95 = vmatpush.msra.mxu0 %v42
    %96 = vmatpush.msra.mxu0 %v41
    %97 = vmatpush.msra.mxu0 %v40
    %98 = vmatpush.msra.mxu0 %v39
    %99 = vmatpush.msra.mxu0 %v38
    %100 = vmatpush.msra.mxu0 %v37
    %101 = vmatpush.msra.mxu0 %v36
    %102 = vmatpush.msra.mxu0 %v35
    %103 = vmatpush.msra.mxu0 %v34
    %104 = vmatmul.f32.gmra.mxu0 %v32
    %v105 = vpop.f32.mrf.mxu0
    %v106 = vadd.f32 %v87, %v105
    %107 = vmatmul.f32.gmra.mxu0 %v33
    %v108 = vpop.f32.mrf.mxu0
    %v109 = vadd.f32 %v87, %v108
    %110 = vdwg.mxu0
    %v111 = vlaneseq
    %v112 = vand.u32 %v111, 127
    %vm113 = vcmp.ge.s32.totalorder %v112, 1
    %v114 = vsel %vm113, %v30, 0.0
    %v115 = vsel %vm113, %v31, 0.0
    %v116 = vadd.f32 %v106, %v114
    %v117 = vadd.f32 %v109, %v115
    %v118 = vperm.slane %v85, 0
    %119 = vmatpush.msra.mxu0 %v66
    %120 = vmatpush.msra.mxu0 %v65
    %121 = vmatpush.msra.mxu0 %v64
    %122 = vmatpush.msra.mxu0 %v63
    %123 = vmatpush.msra.mxu0 %v62
    %124 = vmatpush.msra.mxu0 %v61
    %125 = vmatpush.msra.mxu0 %v60
    %126 = vmatpush.msra.mxu0 %v59
    %127 = vmatpush.msra.mxu0 %v58
    %128 = vmatpush.msra.mxu0 %v57
    %129 = vmatpush.msra.mxu0 %v56
    %130 = vmatpush.msra.mxu0 %v55
    %131 = vmatpush.msra.mxu0 %v54
    %132 = vmatpush.msra.mxu0 %v53
    %133 = vmatpush.msra.mxu0 %v52
    %134 = vmatpush.msra.mxu0 %v51
    %135 = vmatmul.f32.gmra.mxu0 %v30
    %v136 = vpop.f32.mrf.mxu0
    %v137 = vadd.f32 %v118, %v136
    %138 = vmatmul.f32.gmra.mxu0 %v31
    %v139 = vpop.f32.mrf.mxu0
    %v140 = vadd.f32 %v118, %v139
    %141 = vmatmul.f32.gmra.mxu0 %v116
    %v142 = vpop.f32.mrf.mxu0
    %v143 = vadd.f32 %v118, %v142
    %144 = vmatmul.f32.gmra.mxu0 %v117
    %v145 = vpop.f32.mrf.mxu0
    %v146 = vadd.f32 %v118, %v145
    %147 = vdwg.mxu0
    %v148 = vmax.f32 %v137, 0.0
    %v149 = vmax.f32 %v140, 0.0
    %v150 = vmax.f32 %v143, 0.0
    %v151 = vmax.f32 %v146, 0.0
    %v152 = vperm.slane %v86, 0
    %153 = vmatpush.msra.mxu0 %v83
    %154 = vmatpush.msra.mxu0 %v82
    %155 = vmatpush.msra.mxu0 %v81
    %156 = vmatpush.msra.mxu0 %v80
    %157 = vmatpush.msra.mxu0 %v79
    %158 = vmatpush.msra.mxu0 %v78
    %159 = vmatpush.msra.mxu0 %v77
    %160 = vmatpush.msra.mxu0 %v76
    %161 = vmatpush.msra.mxu0 %v75
    %162 = vmatpush.msra.mxu0 %v74
    %163 = vmatpush.msra.mxu0 %v73
    %164 = vmatpush.msra.mxu0 %v72
    %165 = vmatpush.msra.mxu0 %v71
    %166 = vmatpush.msra.mxu0 %v70
    %167 = vmatpush.msra.mxu0 %v69
    %168 = vmatpush.msra.mxu0 %v68
    %169 = vmatmul.f32.gmra.mxu0 %v148
    %v170 = vpop.f32.mrf.mxu0
    %v171 = vadd.f32 %v152, %v170
    %172 = vmatmul.f32.gmra.mxu0 %v149
    %v173 = vpop.f32.mrf.mxu0
    %v174 = vadd.f32 %v152, %v173
    %175 = vmatmul.f32.gmra.mxu0 %v150
    %v176 = vpop.f32.mrf.mxu0
    %v177 = vadd.f32 %v152, %v176
    %178 = vmatmul.f32.gmra.mxu0 %v151
    %v179 = vpop.f32.mrf.mxu0
    %v180 = vadd.f32 %v152, %v179
    %181 = vdwg.mxu0
    %v182 = vmin.f32 %v171, 0.0
    %v183 = vmin.f32 %v174, 0.0
    %v184 = vmin.f32 %v177, 0.0
    %v185 = vmin.f32 %v180, 0.0
    %v186 = vand.u32 2147483647, %v171
    %v187 = vand.u32 2147483647, %v174
    %v188 = vand.u32 2147483647, %v177
    %v189 = vand.u32 2147483647, %v180
    %v190 = vsub.f32 0.0, %v186
    %v191 = vsub.f32 0.0, %v187
    %v192 = vsub.f32 0.0, %v188
    %v193 = vsub.f32 0.0, %v189
    %v194 = vmul.f32 %v190, 1.442695
    %v195 = vpow.pop %v194
    %v196 = vmul.f32 %v191, 1.442695
    %v197 = vpow.pop %v196
    %v198 = vmul.f32 %v192, 1.442695
    %v199 = vpow.pop %v198
    %v200 = vmul.f32 %v193, 1.442695
    %v201 = vpow.pop %v200
    %v202 = vadd.f32 %v195, 1.0
    %v203 = vadd.f32 %v197, 1.0
    %v204 = vadd.f32 %v199, 1.0
    %v205 = vadd.f32 %v201, 1.0
    %v206 = vlog2.pop %v202
    %v207 = vmul.f32 %v206, 0.6931472
    %v208 = vlog2.pop %v203
    %v209 = vmul.f32 %v208, 0.6931472
    %v210 = vlog2.pop %v204
    %v211 = vmul.f32 %v210, 0.6931472
    %v212 = vlog2.pop %v205
    %v213 = vmul.f32 %v212, 0.6931472
    %v214 = vsub.f32 %v182, %v207
    %v215 = vsub.f32 %v183, %v209
    %v216 = vsub.f32 %v184, %v211
    %v217 = vsub.f32 %v185, %v213
    %v218 = vsub.f32 %v214, %v171
    %v219 = vsub.f32 %v215, %v174
    %v220 = vsub.f32 %v216, %v177
    %v221 = vsub.f32 %v217, %v180
    %v222 = vlaneseq
    %v223 = vshrl.u32 %v222, 7
    %v224 = vadd.s32 %v223, 8
    %v225 = vadd.s32 %v223, 16
    %v226 = vadd.s32 %v223, 24
    %vm227 = vcmp.ge.s32.totalorder %v223, 16
    %vm228 = vcmp.ge.s32.totalorder %v224, 16
    %vm229 = vcmp.ge.s32.totalorder %v225, 16
    %vm230 = vcmp.ge.s32.totalorder %v226, 16
    %v231 = vsel %vm227, %v214, 0.0
    %v232 = vsel %vm228, %v215, 0.0
    %v233 = vsel %vm229, %v216, 0.0
    %v234 = vsel %vm230, %v217, 0.0
    %v235 = vsel %vm227, %v218, %v214
    %v236 = vsel %vm228, %v219, %v215
    %v237 = vsel %vm229, %v220, %v216
    %v238 = vsel %vm230, %v221, %v217
    %vm239 = vcmp.eq.s32.totalorder %v112, 0
    %vm240 = vcmp.eq.s32.totalorder %v112, 1
    %v241 = vsel %vm240, %v235, 0.0
    %v242 = vsel %vm240, %v236, 0.0
    %v243 = vsel %vm240, %v237, 0.0
    %v244 = vsel %vm240, %v238, 0.0
    %v245 = vsel %vm239, %v231, %v241
    %v246 = vsel %vm239, %v232, %v242
    %v247 = vsel %vm239, %v233, %v243
    %v248 = vsel %vm239, %v234, %v244
    %v249 = vadd.f32 %v245, %v246
    %v250 = vadd.f32 %v249, %v247
    %v251 = vadd.f32 %v250, %v248
    %v252 = vrot.slane %v251, 4
    %v253 = vadd.f32 %v251, %v252
    %v254 = vrot.slane %v253, 2
    %v255 = vadd.f32 %v253, %v254
    %v256 = vrot.slane %v255, 1
    %v257 = vadd.f32 %v255, %v256
    %v258 = vsub.f32 0.0, %v257
    %v259 = vmul.f32 %v258, 0.0625
    %260 = vst [vmem:[%s3] sm:$0x1] %v259
    // Predicated region
    $region18: #{gan_forward.1} parent=1 // pred_check
      _
    $region19: #{gan_forward.1} parent=1 // pred_check_branch
      %262 = sbr.rel (0) target = $region21
    $region20: #{gan_forward.1} parent=1 // pred_region
      _
    $region21: #{gan_forward.1} parent=1 // pred_fallthru
      _
    // Predicated region
    $region22: #{gan_forward.1} parent=1 // pred_check
      _
    $region23: #{gan_forward.1} parent=1 // pred_check_branch
      %264 = sbr.rel (0) target = $region25
    $region24: #{gan_forward.1} parent=1 // pred_region
      _
    $region25: #{gan_forward.1} parent=1 // pred_fallthru
      _
    %265 = vsyncpa [#allocation3], 1

</llo_original>
